<compile_context>
chip_gen: v7x
topology: tpu7x:2x2x1
jax: 0.10.0
libtpu: 0.0.40
codegen_flags: <defaults>
</compile_context>

<pallas_src>
import functools

import jax
import jax.numpy as jnp
from jax.experimental import pallas as pl
from jax.experimental.pallas import tpu as pltpu

ALPHA = 0.8
BETA = 0.5
LANES = 128
SUBLANES = 8


def _tversky_kernel(x_ref, t_ref, o_ref, acc_ref, *, tile_rows,
                    tiles_per_shard, n_valid, need_mask):
    s = pl.program_id(0)   # shard (parallel across TCs on v7x)
    j = pl.program_id(1)   # tile within shard (arbitrary / reduction)

    @pl.when(j == 0)
    def _():
        acc_ref[...] = jnp.zeros_like(acc_ref)

    p = jax.nn.sigmoid(x_ref[...].astype(jnp.float32))
    t = t_ref[...].astype(jnp.float32)

    if need_mask:
        # Global row of the first row in this tile (uses the *unclamped*
        # logical tile index, so clamped/OOB tiles mask to zero).
        row0 = (s * tiles_per_shard + j) * tile_rows
        full_rows = n_valid // LANES
        rem = n_valid - full_rows * LANES
        rid = jax.lax.broadcasted_iota(jnp.int32, p.shape, 0) + row0
        lid = jax.lax.broadcasted_iota(jnp.int32, p.shape, 1)
        valid = (rid < full_rows) | ((rid == full_rows) & (lid < rem))
        p = jnp.where(valid, p, 0.0)
        t = jnp.where(valid, t, 0.0)

    # Reduce only along the (tile-aligned) leading axis: pure VPU adds into a
    # vreg-shaped partial accumulator; no per-step XLU full reduction.
    g = tile_rows // SUBLANES
    p3 = p.reshape(g, SUBLANES, LANES)
    t3 = t.reshape(g, SUBLANES, LANES)
    acc_ref[0] += jnp.sum(p3 * t3, axis=0)   # partial sum(p*t)
    acc_ref[1] += jnp.sum(p3, axis=0)        # partial sum(p)
    acc_ref[2] += jnp.sum(t3, axis=0)        # partial sum(t)

    @pl.when(j == pl.num_programs(1) - 1)
    def _():
        o_ref[0] = acc_ref[...]


def _sublane_multiple(dtype):
    # f32 -> 8, bf16 -> 16, int8/bool -> 32 second-to-last-dim granularity.
    return max(SUBLANES, 32 // jnp.dtype(dtype).itemsize)


def tversky_loss(inputs, targets, smooth=1.0, alpha=ALPHA, beta=BETA,
                 tile_rows=2048, num_shards=2):
    x = inputs.reshape(-1)
    t = targets.reshape(-1)
    n = x.shape[0]

    sub = max(_sublane_multiple(x.dtype), _sublane_multiple(t.dtype))
    granule = sub * LANES

    pad = (-n) % granule
    if pad:
        # Rare path: n not a multiple of sub*128 -> minimal zero-pad copy
        # (invalid elements are masked in-kernel, no sigmoid(-inf) tricks).
        x = jnp.pad(x, (0, pad))
        t = jnp.pad(t, (0, pad))
    rows = (n + pad) // LANES

    # Round the tile to the sublane granule and clamp to the array extent.
    tile_rows = max(sub, (tile_rows // sub) * sub)
    tile_rows = min(tile_rows, rows)

    x2 = x.reshape(rows, LANES)
    t2 = t.reshape(rows, LANES)

    tiles_total = pl.cdiv(rows, tile_rows)
    num_shards = max(1, min(num_shards, tiles_total))
    tiles_per_shard = pl.cdiv(tiles_total, num_shards)

    # Any padded / over-covered elements at all?  (Static at trace time.)
    need_mask = (pad != 0) or (num_shards * tiles_per_shard * tile_rows != rows)

    def in_map(s, j):
        # Clamp so over-covering shards re-fetch a valid block; their logical
        # (unclamped) index makes the in-kernel mask zero the contribution.
        return (jnp.minimum(s * tiles_per_shard + j, tiles_total - 1), 0)

    kernel = functools.partial(
        _tversky_kernel, tile_rows=tile_rows, tiles_per_shard=tiles_per_shard,
        n_valid=n, need_mask=need_mask)

    bytes_in = (x2.size * x2.dtype.itemsize + t2.size * t2.dtype.itemsize)
    out_bytes = num_shards * 3 * SUBLANES * LANES * 4
    cost = pl.CostEstimate(flops=8 * n, transcendentals=n,
                           bytes_accessed=bytes_in + out_bytes)

    partials = pl.pallas_call(
        kernel,
        out_shape=jax.ShapeDtypeStruct((num_shards, 3, SUBLANES, LANES),
                                       jnp.float32),
        grid_spec=pltpu.PrefetchScalarGridSpec(
            num_scalar_prefetch=0,
            grid=(num_shards, tiles_per_shard),
            in_specs=[
                pl.BlockSpec((tile_rows, LANES), in_map),
                pl.BlockSpec((tile_rows, LANES), in_map),
            ],
            out_specs=pl.BlockSpec((1, 3, SUBLANES, LANES),
                                   lambda s, j: (s, 0, 0, 0)),
            scratch_shapes=[pltpu.VMEM((3, SUBLANES, LANES), jnp.float32)],
        ),
        compiler_params=pltpu.CompilerParams(
            dimension_semantics=("parallel", "arbitrary"),
            vmem_limit_bytes=32 * 1024 * 1024),
        cost_estimate=cost,
    )(x2, t2)

    # Tiny final reduction + scalar Tversky math in plain JAX.
    sums = jnp.sum(partials, axis=(0, 2, 3))       # [sum(p*t), sum(p), sum(t)]
    tp = sums[0]
    fp = sums[1] - tp                              # sum((1-t)*p)
    fn = sums[2] - tp                              # sum(t*(1-p))
    tversky = (tp + smooth) / (tp + alpha * fp + beta * fn + smooth)
    return 1.0 - tversky


def tversky_loss_ref(inputs, targets, smooth=1.0, alpha=ALPHA, beta=BETA):
    p = jax.nn.sigmoid(inputs.astype(jnp.float32)).reshape(-1)
    t = targets.astype(jnp.float32).reshape(-1)
    TP = jnp.sum(p * t)
    FP = jnp.sum((1.0 - t) * p)
    FN = jnp.sum(t * (1.0 - p))
    return 1.0 - (TP + smooth) / (TP + alpha * FP + beta * FN + smooth)


if __name__ == "__main__":
    key = jax.random.PRNGKey(0)
    k1, k2, k3, k4 = jax.random.split(key, 4)

    # NCHW logits and binary targets, as the PyTorch module implies.
    x = jax.random.normal(k1, (2, 4, 16, 16), dtype=jnp.float32)
    t = (jax.random.uniform(k2, (2, 4, 16, 16)) > 0.5).astype(jnp.float32)
    ref = tversky_loss_ref(x, t)

    # Small tile so the tiny example exercises multiple tiles and both shards
    # of the parallel axis.
    loss = tversky_loss(x, t, tile_rows=8)
    jax.block_until_ready(loss)
    assert jnp.allclose(loss, ref, atol=1e-5, rtol=1e-5), (loss, ref)

    # Default (large) tile gets clamped to the array; exercises that path.
    loss2 = tversky_loss(x, t)
    jax.block_until_ready(loss2)
    assert jnp.allclose(loss2, ref, atol=1e-5, rtol=1e-5), (loss2, ref)

    # Ragged element count (not a multiple of 8*128) exercises the in-kernel
    # tail masking path.
    xr = jax.random.normal(k3, (3, 5, 7, 11), dtype=jnp.float32)
    tr = (jax.random.uniform(k4, (3, 5, 7, 11)) > 0.5).astype(jnp.float32)
    loss3 = tversky_loss(xr, tr, tile_rows=8)
    jax.block_until_ready(loss3)
    ref3 = tversky_loss_ref(xr, tr)
    assert jnp.allclose(loss3, ref3, atol=1e-5, rtol=1e-5), (loss3, ref3)

    print("KERNEL_OK")
</pallas_src>

<mosaic_0001>
module attributes {stable_mosaic.version = 11 : i64} {
  func.func @_tversky_kernel(%arg0: i32, %arg1: i32, %arg2: memref<8x128xf32, #tpu.memory_space<vmem>>, %arg3: memref<8x128xf32, #tpu.memory_space<vmem>>, %arg4: memref<1x3x8x128xf32, #tpu.memory_space<vmem>>, %arg5: memref<3x8x128xf32, #tpu.memory_space<vmem>>) attributes {dimension_semantics = [#tpu.dimension_semantics<parallel>, #tpu.dimension_semantics<arbitrary>], iteration_bounds = array<i64: 2, 1>, scalar_prefetch = 0 : i64, scratch_operands = 1 : i64, tpu.core_type = #tpu.core_type<tc>, window_params = [{transform_indices = @transform_0, window_bounds = array<i64: 8, 128>}, {transform_indices = @transform_1, window_bounds = array<i64: 8, 128>}, {transform_indices = @transform_2, window_bounds = array<i64: 1, 3, 8, 128>}]} {
    %c0_i32 = arith.constant 0 : i32
    %0 = arith.cmpi eq, %arg1, %c0_i32 : i32
    %1 = arith.extui %0 : i1 to i32
    %c0_i32_0 = arith.constant 0 : i32
    %2 = arith.cmpi ne, %1, %c0_i32_0 : i32
    scf.if %2 {
      %cst_25 = arith.constant 0.000000e+00 : f32
      %37 = vector.broadcast %cst_25 : f32 to vector<3x8x128xf32>
      %c0_26 = arith.constant 0 : index
      %c0_27 = arith.constant 0 : index
      %c0_28 = arith.constant 0 : index
      %38 = vector.load %arg5[%c0_26, %c0_27, %c0_28] : memref<3x8x128xf32, #tpu.memory_space<vmem>>, vector<3x8x128xf32>
      tpu.vector_store %arg5[%c0_26, %c0_27, %c0_28], %37 {strides = array<i32>} : memref<3x8x128xf32, #tpu.memory_space<vmem>>, vector<3x8x128xf32>,
    } else {
    }
    %c0 = arith.constant 0 : index
    %c0_1 = arith.constant 0 : index
    %3 = vector.load %arg2[%c0, %c0_1] : memref<8x128xf32, #tpu.memory_space<vmem>>, vector<8x128xf32>
    %4 = arith.negf %3 : vector<8x128xf32>
    %5 = math.exp %4 : vector<8x128xf32>
    %cst = arith.constant 1.000000e+00 : f32
    %6 = vector.broadcast %cst : f32 to vector<8x128xf32>
    %7 = arith.addf %6, %5 : vector<8x128xf32>
    %8 = arith.divf %6, %7 : vector<8x128xf32>
    %c0_2 = arith.constant 0 : index
    %c0_3 = arith.constant 0 : index
    %9 = vector.load %arg3[%c0_2, %c0_3] : memref<8x128xf32, #tpu.memory_space<vmem>>, vector<8x128xf32>
    %10 = vector.shape_cast %8 : vector<8x128xf32> to vector<1x8x128xf32>
    %11 = vector.shape_cast %9 : vector<8x128xf32> to vector<1x8x128xf32>
    %c0_4 = arith.constant 0 : index
    %c0_5 = arith.constant 0 : index
    %c0_6 = arith.constant 0 : index
    %12 = vector.load %arg5[%c0_4, %c0_5, %c0_6] : memref<3x8x128xf32, #tpu.memory_space<vmem>>, vector<1x8x128xf32>
    %13 = vector.shape_cast %12 : vector<1x8x128xf32> to vector<8x128xf32>
    %14 = arith.mulf %10, %11 : vector<1x8x128xf32>
    %cst_7 = arith.constant dense<0.000000e+00> : vector<8x128xf32>
    %15 = vector.multi_reduction <add>, %14, %cst_7 [0] : vector<1x8x128xf32> to vector<8x128xf32>
    %16 = arith.addf %13, %15 : vector<8x128xf32>
    %c0_8 = arith.constant 0 : index
    %c0_9 = arith.constant 0 : index
    %c0_10 = arith.constant 0 : index
    %17 = vector.load %arg5[%c0_8, %c0_9, %c0_10] : memref<3x8x128xf32, #tpu.memory_space<vmem>>, vector<1x8x128xf32>
    %18 = vector.shape_cast %17 : vector<1x8x128xf32> to vector<8x128xf32>
    %19 = vector.shape_cast %16 : vector<8x128xf32> to vector<1x8x128xf32>
    tpu.vector_store %arg5[%c0_8, %c0_9, %c0_10], %19 {strides = array<i32>} : memref<3x8x128xf32, #tpu.memory_space<vmem>>, vector<1x8x128xf32>,
    %c1 = arith.constant 1 : index
    %c0_11 = arith.constant 0 : index
    %c0_12 = arith.constant 0 : index
    %20 = vector.load %arg5[%c1, %c0_11, %c0_12] : memref<3x8x128xf32, #tpu.memory_space<vmem>>, vector<1x8x128xf32>
    %21 = vector.shape_cast %20 : vector<1x8x128xf32> to vector<8x128xf32>
    %cst_13 = arith.constant dense<0.000000e+00> : vector<8x128xf32>
    %22 = vector.multi_reduction <add>, %10, %cst_13 [0] : vector<1x8x128xf32> to vector<8x128xf32>
    %23 = arith.addf %21, %22 : vector<8x128xf32>
    %c1_14 = arith.constant 1 : index
    %c0_15 = arith.constant 0 : index
    %c0_16 = arith.constant 0 : index
    %24 = vector.load %arg5[%c1_14, %c0_15, %c0_16] : memref<3x8x128xf32, #tpu.memory_space<vmem>>, vector<1x8x128xf32>
    %25 = vector.shape_cast %24 : vector<1x8x128xf32> to vector<8x128xf32>
    %26 = vector.shape_cast %23 : vector<8x128xf32> to vector<1x8x128xf32>
    tpu.vector_store %arg5[%c1_14, %c0_15, %c0_16], %26 {strides = array<i32>} : memref<3x8x128xf32, #tpu.memory_space<vmem>>, vector<1x8x128xf32>,
    %c2 = arith.constant 2 : index
    %c0_17 = arith.constant 0 : index
    %c0_18 = arith.constant 0 : index
    %27 = vector.load %arg5[%c2, %c0_17, %c0_18] : memref<3x8x128xf32, #tpu.memory_space<vmem>>, vector<1x8x128xf32>
    %28 = vector.shape_cast %27 : vector<1x8x128xf32> to vector<8x128xf32>
    %cst_19 = arith.constant dense<0.000000e+00> : vector<8x128xf32>
    %29 = vector.multi_reduction <add>, %11, %cst_19 [0] : vector<1x8x128xf32> to vector<8x128xf32>
    %30 = arith.addf %28, %29 : vector<8x128xf32>
    %c2_20 = arith.constant 2 : index
    %c0_21 = arith.constant 0 : index
    %c0_22 = arith.constant 0 : index
    %31 = vector.load %arg5[%c2_20, %c0_21, %c0_22] : memref<3x8x128xf32, #tpu.memory_space<vmem>>, vector<1x8x128xf32>
    %32 = vector.shape_cast %31 : vector<1x8x128xf32> to vector<8x128xf32>
    %33 = vector.shape_cast %30 : vector<8x128xf32> to vector<1x8x128xf32>
    tpu.vector_store %arg5[%c2_20, %c0_21, %c0_22], %33 {strides = array<i32>} : memref<3x8x128xf32, #tpu.memory_space<vmem>>, vector<1x8x128xf32>,
    %c0_i32_23 = arith.constant 0 : i32
    %34 = arith.cmpi eq, %arg1, %c0_i32_23 : i32
    %35 = arith.extui %34 : i1 to i32
    %c0_i32_24 = arith.constant 0 : i32
    %36 = arith.cmpi ne, %35, %c0_i32_24 : i32
    scf.if %36 {
      %c0_25 = arith.constant 0 : index
      %c0_26 = arith.constant 0 : index
      %c0_27 = arith.constant 0 : index
      %37 = vector.load %arg5[%c0_25, %c0_26, %c0_27] : memref<3x8x128xf32, #tpu.memory_space<vmem>>, vector<3x8x128xf32>
      %c0_28 = arith.constant 0 : index
      %c0_29 = arith.constant 0 : index
      %c0_30 = arith.constant 0 : index
      %c0_31 = arith.constant 0 : index
      %38 = vector.load %arg4[%c0_28, %c0_29, %c0_30, %c0_31] : memref<1x3x8x128xf32, #tpu.memory_space<vmem>>, vector<1x3x8x128xf32>
      %39 = vector.shape_cast %38 : vector<1x3x8x128xf32> to vector<3x8x128xf32>
      %40 = vector.shape_cast %37 : vector<3x8x128xf32> to vector<1x3x8x128xf32>
      tpu.vector_store %arg4[%c0_28, %c0_29, %c0_30, %c0_31], %40 {strides = array<i32>} : memref<1x3x8x128xf32, #tpu.memory_space<vmem>>, vector<1x3x8x128xf32>,
    } else {
    }
    return
  }
  func.func @transform_0(%arg0: i32, %arg1: i32) -> (i32, i32) {
    %c1_i32 = arith.constant 1 : i32
    %0 = arith.muli %arg0, %c1_i32 : i32
    %1 = arith.addi %0, %arg1 : i32
    %c1_i32_0 = arith.constant 1 : i32
    %2 = arith.minsi %1, %c1_i32_0 : i32
    %c0_i32 = arith.constant 0 : i32
    %c0_i32_1 = arith.constant 0 : i32
    return %2, %c0_i32 : i32, i32
  }
  func.func @transform_1(%arg0: i32, %arg1: i32) -> (i32, i32) {
    %c1_i32 = arith.constant 1 : i32
    %0 = arith.muli %arg0, %c1_i32 : i32
    %1 = arith.addi %0, %arg1 : i32
    %c1_i32_0 = arith.constant 1 : i32
    %2 = arith.minsi %1, %c1_i32_0 : i32
    %c0_i32 = arith.constant 0 : i32
    %c0_i32_1 = arith.constant 0 : i32
    return %2, %c0_i32 : i32, i32
  }
  func.func @transform_2(%arg0: i32, %arg1: i32) -> (i32, i32, i32, i32) {
    %c0_i32 = arith.constant 0 : i32
    %c0_i32_0 = arith.constant 0 : i32
    %c0_i32_1 = arith.constant 0 : i32
    %c0_i32_2 = arith.constant 0 : i32
    return %arg0, %c0_i32, %c0_i32_0, %c0_i32_1 : i32, i32, i32, i32
  }
}

</mosaic_0001>

<llo_original>
// kernel: tpu_custom_call.1
$region0: #{tpu_custom_call.1}
  #allocation0 [shape = 'u32[]', space=smem, size = 0x4, offset = 0x4, fixed_abs, tag = 'smem constant byte address 0x4 - core index']
  #allocation1 [shape = 'u32[144,128]{1,0:T(1,128)}', space=vmem, size = 0x12000, scoped, tag = 'internal scratch']
  #allocation2 [shape = 'f32[3,8,128]{2,1,0:T(8,128)}', space=vmem, size = 0x3000, scoped, tag = 'scratch operand']
  %s0 = inlined_call_operand.hbm [shape: f32[16,128], index: 0, kind: input, shape index: {}]
  %s1 = inlined_call_operand.hbm [shape: f32[16,128], index: 1, kind: input, shape index: {}]
  %s2 = inlined_call_operand.hbm [shape: f32[2,3,8,128], index: 2, kind: output, shape index: {}]
  %s3 = sld [smem:[#allocation0]]
  $region57: #{tpu_custom_call.1} parent=0
    _
  %s5 = ssub.s32 1, %s3
  %s6 = scalar_select 0, %s5, %s3
  $region1: #{tpu_custom_call.1} parent=0
    #allocation3 [shape = 'u8[8192]{0}', space=vmem, size = 0x2000, scoped, tag = 'input window, operand 0']
    #allocation4 [shape = 's32[2]{0}', space=sflag, size = 0x8, scoped, tag = 'scoped memory for tpu_custom_call.1']
    #allocation5 [shape = 's32[2]{0}', space=sflag, size = 0x8, scoped, tag = 'scoped memory for tpu_custom_call.1']
    #allocation6 [shape = 'u8[8192]{0}', space=vmem, size = 0x2000, scoped, tag = 'input window, operand 1']
    #allocation7 [shape = 's32[2]{0}', space=sflag, size = 0x8, scoped, tag = 'scoped memory for tpu_custom_call.1']
    #allocation8 [shape = 'u8[24576]{0}', space=vmem, size = 0x6000, scoped, tag = 'output window, operand 0']
    %7 = vsyncpa [#allocation4], 0
    %s8 = scalar_lea.sflag [#allocation4], 1
    %9 = vsyncpa %s8, 0
    %10 = vsyncpa [#allocation7], 0
    %s11 = scalar_lea.sflag [#allocation7], 1
    %12 = vsyncpa %s11, 0
    %13 = vsyncpa [#allocation5], 0
    %s14 = scalar_lea.sflag [#allocation5], 1
    %15 = vsyncpa %s14, 0
    loop: start=0, step=1, limit=4
    $region2: #{tpu_custom_call.1} parent=1 // loop_pre_header
      _
    $region3: #{tpu_custom_call.1} parent=1 // loop_header
      %s17 = sphi 0, %s21
      %p18 = scmp.ge.s32.totalorder %s17, 4
      %s24 = sphi 0, %s36
      %s25 = sphi 0, %s32
      %s26 = sphi 0, %s24
      %s27 = sphi 0, %s25
      %s28 = sphi 0, %s26
      %s29 = sphi 0, %s27
      %s45 = sphi 0, %s47
      %s48 = sphi 0, %s45
      %s49 = sphi 0, %s48
      %s65 = sphi 0, %s49
      %s77 = sphi 0, %s79
      %s80 = sphi 0, %s77
      %s81 = sphi 0, %s80
      %s97 = sphi 0, %s81
      %s103 = sphi 0, %s105
      %s106 = sphi 0, %s103
      %s107 = sphi 0, %s106
      %s123 = sphi 0, %s107
    $region4: #{tpu_custom_call.1} parent=1 // loop_header_branch
      %20 = sbr.rel (%p18) target = $region8
    $region5: #{tpu_custom_call.1} parent=1 // loop_body
      %s22 = ssub.s32 %s17, 1
      %s23 = ssub.s32 %s17, 2
      %s30 = sadd.s32 1, %s25
      %p31 = scmp.ge.s32.totalorder %s30, 1
      %s32 = scalar_select %p31, 0, %s30
      %s33 = sadd.s32 1, %s24
      %s34 = scalar_select %p31, %s33, %s24
      %p35 = scmp.ge.s32.totalorder %s34, 2
      %s36 = scalar_select %p35, 0, %s34
      %s37 = sadd.s32 %s24, %s25
      %p38 = scmp.lt.s32.totalorder %s37, 1
      %s39 = scalar_select %p38, %s37, 1
      %s40 = sadd.s32 %s36, %s32
      %p41 = scmp.lt.s32.totalorder %s40, 1
      %s42 = scalar_select %p41, %s40, 1
      %s43 = ssub.s32 %s39, %s42
      %p44 = scmp.eq.s32.totalorder %s43, 0
      %s46 = sadd.s32 %s45, 1
      %s47 = scalar_select %p44, %s45, %s46
      %p50 = pneg %p44
      %p51 = scmp.eq.s32.totalorder %s17, 1
      %p52 = por %p50, %p51
      %p53 = scmp.ne.s32.totalorder %s45, %s48
      %p54 = scmp.eq.s32.totalorder %s17, 0
      %p55 = por %p53, %p54
      %p56 = scmp.ne.s32.totalorder %s45, %s48
      %p57 = scmp.eq.s32.totalorder %s22, 1
      %p58 = por %p56, %p57
      %p59 = scmp.ne.s32.totalorder %s48, %s49
      %p60 = scmp.eq.s32.totalorder %s22, 0
      %p61 = por %p59, %p60
      %p62 = scmp.ne.s32.totalorder %s48, %s49
      %p63 = scmp.eq.s32.totalorder %s23, 1
      %p64 = por %p62, %p63
      %p66 = scmp.ne.s32.totalorder %s49, %s65
      %p67 = scmp.eq.s32.totalorder %s23, 0
      %p68 = por %p66, %p67
      %s69 = sadd.s32 %s24, %s25
      %p70 = scmp.lt.s32.totalorder %s69, 1
      %s71 = scalar_select %p70, %s69, 1
      %s72 = sadd.s32 %s36, %s32
      %p73 = scmp.lt.s32.totalorder %s72, 1
      %s74 = scalar_select %p73, %s72, 1
      %s75 = ssub.s32 %s71, %s74
      %p76 = scmp.eq.s32.totalorder %s75, 0
      %s78 = sadd.s32 %s77, 1
      %s79 = scalar_select %p76, %s77, %s78
      %p82 = pneg %p76
      %p83 = scmp.eq.s32.totalorder %s17, 1
      %p84 = por %p82, %p83
      %p85 = scmp.ne.s32.totalorder %s77, %s80
      %p86 = scmp.eq.s32.totalorder %s17, 0
      %p87 = por %p85, %p86
      %p88 = scmp.ne.s32.totalorder %s77, %s80
      %p89 = scmp.eq.s32.totalorder %s22, 1
      %p90 = por %p88, %p89
      %p91 = scmp.ne.s32.totalorder %s80, %s81
      %p92 = scmp.eq.s32.totalorder %s22, 0
      %p93 = por %p91, %p92
      %p94 = scmp.ne.s32.totalorder %s80, %s81
      %p95 = scmp.eq.s32.totalorder %s23, 1
      %p96 = por %p94, %p95
      %p98 = scmp.ne.s32.totalorder %s81, %s97
      %p99 = scmp.eq.s32.totalorder %s23, 0
      %p100 = por %p98, %p99
      %s101 = ssub.s32 %s24, %s36
      %p102 = scmp.eq.s32.totalorder %s101, 0
      %s104 = sadd.s32 %s103, 1
      %s105 = scalar_select %p102, %s103, %s104
      %p108 = pneg %p102
      %p109 = scmp.eq.s32.totalorder %s17, 1
      %p110 = por %p108, %p109
      %p111 = scmp.ne.s32.totalorder %s103, %s106
      %p112 = scmp.eq.s32.totalorder %s17, 0
      %p113 = por %p111, %p112
      %p114 = scmp.ne.s32.totalorder %s103, %s106
      %p115 = scmp.eq.s32.totalorder %s22, 1
      %p116 = por %p114, %p115
      %p117 = scmp.ne.s32.totalorder %s106, %s107
      %p118 = scmp.eq.s32.totalorder %s22, 0
      %p119 = por %p117, %p118
      %p120 = scmp.ne.s32.totalorder %s106, %s107
      %p121 = scmp.eq.s32.totalorder %s23, 1
      %p122 = por %p120, %p121
      %p124 = scmp.ne.s32.totalorder %s107, %s123
      %p125 = scmp.eq.s32.totalorder %s23, 0
      %p126 = por %p124, %p125
      %p127 = scmp.le.s32.totalorder 1, %s17
      %p128 = scmp.lt.s32.totalorder %s17, 3
      %p129 = pnand %p127, %p128
      %p130 = pneg %p129
      // Predicated region
      $region9: #{tpu_custom_call.1} parent=5 // pred_check
        _
      $region10: #{tpu_custom_call.1} parent=5 // pred_check_branch
        %132 = sbr.rel (%p129) target = $region12
      $region11: #{tpu_custom_call.1} parent=5 // pred_region
        %s133 = ssub.s32 %s17, 1
      $region12: #{tpu_custom_call.1} parent=5 // pred_fallthru
        _
      %p134 = scmp.lt.s32.totalorder %s17, 2
      // Predicated region
      $region13: #{tpu_custom_call.1} parent=5 // pred_check
        %p135 = pneg %p134
      $region14: #{tpu_custom_call.1} parent=5 // pred_check_branch
        %137 = sbr.rel (%p135) target = $region16
      $region15: #{tpu_custom_call.1} parent=5 // pred_region
        // Predicated region
        $region17: #{tpu_custom_call.1} parent=15 // pred_check
          %p138 = pneg %p55
        $region18: #{tpu_custom_call.1} parent=15 // pred_check_branch
          %140 = sbr.rel (%p138) target = $region20
        $region19: #{tpu_custom_call.1} parent=15 // pred_region
          %s141 = sand.u32 %s45, 1
          %s142 = scalar_lea.sflag [#allocation4], %s141
          %s143 = sand.u32 %s45, 1
          %s144 = smul.addr %s143, 8
          %s145 = scalar_lea.vmem [#allocation3], %s144
          %s146 = sadd.s32 %s24, %s25
          %p147 = scmp.lt.s32.totalorder %s146, 1
          %s148 = scalar_select %p147, %s146, 1
          %s150 = ssub.s32 128, 128
          %151 = vsyncadd %s142, %s150
          %s152 = smul.addr %s148, 128
          %s153 = scalar_lea.hbm %s0, %s152
          %s155 = sshll.u32 %s145, 4
          %s156 = int_to_ptr.vmem [resolvable:$true] %s155
          %158 = dma.hbm_to_vmem [thread:$0]  %s153, 128, %s156, %s142
        $region20: #{tpu_custom_call.1} parent=15 // pred_fallthru
          _
        // Predicated region
        $region21: #{tpu_custom_call.1} parent=15 // pred_check
          %p159 = pneg %p87
        $region22: #{tpu_custom_call.1} parent=15 // pred_check_branch
          %161 = sbr.rel (%p159) target = $region24
        $region23: #{tpu_custom_call.1} parent=15 // pred_region
          %s162 = sand.u32 %s77, 1
          %s163 = scalar_lea.sflag [#allocation7], %s162
          %s164 = sand.u32 %s77, 1
          %s165 = smul.addr %s164, 8
          %s166 = scalar_lea.vmem [#allocation6], %s165
          %s167 = sadd.s32 %s24, %s25
          %p168 = scmp.lt.s32.totalorder %s167, 1
          %s169 = scalar_select %p168, %s167, 1
          %s171 = ssub.s32 128, 128
          %172 = vsyncadd %s163, %s171
          %s173 = smul.addr %s169, 128
          %s174 = scalar_lea.hbm %s1, %s173
          %s176 = sshll.u32 %s166, 4
          %s177 = int_to_ptr.vmem [resolvable:$true] %s176
          %179 = dma.hbm_to_vmem [thread:$0]  %s174, 128, %s177, %s163
        $region24: #{tpu_custom_call.1} parent=15 // pred_fallthru
          _
      $region16: #{tpu_custom_call.1} parent=5 // pred_fallthru
        _
      %p180 = scmp.le.s32.totalorder 1, %s17
      %p181 = scmp.lt.s32.totalorder %s17, 3
      %p182 = pnand %p180, %p181
      %p183 = pneg %p182
      // Predicated region
      $region25: #{tpu_custom_call.1} parent=5 // pred_check
        _
      $region26: #{tpu_custom_call.1} parent=5 // pred_check_branch
        %185 = sbr.rel (%p182) target = $region28
      $region27: #{tpu_custom_call.1} parent=5 // pred_region
        %s186 = ssub.s32 %s17, 1
        %s187 = sand.u32 %s48, 1
        %s188 = scalar_lea.sflag [#allocation4], %s187
        %s189 = sand.u32 %s48, 1
        %s190 = smul.addr %s189, 8
        %s191 = scalar_lea.vmem [#allocation3], %s190
        // Predicated region
        $region29: #{tpu_custom_call.1} parent=27 // pred_check
          %p192 = pneg %p61
        $region30: #{tpu_custom_call.1} parent=27 // pred_check_branch
          %194 = sbr.rel (%p192) target = $region32
        $region31: #{tpu_custom_call.1} parent=27 // pred_region
          %195 = dma.done %s188, 128
        $region32: #{tpu_custom_call.1} parent=27 // pred_fallthru
          _
        %s196 = sand.u32 %s80, 1
        %s197 = scalar_lea.sflag [#allocation7], %s196
        %s198 = sand.u32 %s80, 1
        %s199 = smul.addr %s198, 8
        %s200 = scalar_lea.vmem [#allocation6], %s199
        // Predicated region
        $region33: #{tpu_custom_call.1} parent=27 // pred_check
          %p201 = pneg %p93
        $region34: #{tpu_custom_call.1} parent=27 // pred_check_branch
          %203 = sbr.rel (%p201) target = $region36
        $region35: #{tpu_custom_call.1} parent=27 // pred_region
          %204 = dma.done %s197, 128
        $region36: #{tpu_custom_call.1} parent=27 // pred_fallthru
          _
        %s205 = sand.u32 %s48, 1
        %s206 = scalar_lea.sflag [#allocation4], %s205
        %s207 = sand.u32 %s48, 1
        %s208 = smul.addr %s207, 8
        %s209 = scalar_lea.vmem [#allocation3], %s208
        %p210 = pneg %p61
        %p211 = pneg %p58
        %s212 = sand.u32 %s80, 1
        %s213 = scalar_lea.sflag [#allocation7], %s212
        %s214 = sand.u32 %s80, 1
        %s215 = smul.addr %s214, 8
        %s216 = scalar_lea.vmem [#allocation6], %s215
        %p217 = pneg %p93
        %p218 = pneg %p90
        %p219 = pneg %p119
        %p220 = pneg %p116
        %s221 = sand.u32 %s106, 1
        %s222 = scalar_lea.sflag [#allocation5], %s221
        %s223 = sand.u32 %s106, 1
        %s224 = smul.addr %s223, 24
        %s225 = scalar_lea.vmem [#allocation8], %s224
        %s226 = sadd.s32 %s26, %s27
        %p227 = scmp.lt.s32.totalorder %s226, 1
        %s228 = scalar_select %p227, %s226, 1
        %s229 = sadd.s32 %s26, %s27
        %p230 = scmp.lt.s32.totalorder %s229, 1
        %s231 = scalar_select %p230, %s229, 1
        %p232 = scmp.eq.s32.totalorder %s27, 0
        // Predicated region
        $region37: #{tpu_custom_call.1} parent=27 // pred_check
          %p233 = pneg %p232
        $region38: #{tpu_custom_call.1} parent=27 // pred_check_branch
          %235 = sbr.rel (%p233) target = $region40
        $region39: #{tpu_custom_call.1} parent=27 // pred_region
          %236 = vst [vmem:[#allocation2] sm:$0xff] 0.0
          %237 = vst [vmem:[#allocation2 + $0x8] sm:$0xff] 0.0
          %238 = vst [vmem:[#allocation2 + $0x10] sm:$0xff] 0.0
        $region40: #{tpu_custom_call.1} parent=27 // pred_fallthru
          _
        %v239 = vld [vmem:[%s191] sm:$0xff]
        %v240 = vxor.u32 %v239, 2147483648
        %v241 = vmul.f32 %v240, 1.442695
        %v242 = vpow.pop %v241
        %v243 = vadd.f32 %v242, 1.0
        %v244 = vrcp.pop %v243
        %v245 = vmul.f32 1.0, %v244
        %v246 = vld [vmem:[%s200] sm:$0xff]
        %v247 = vld [vmem:[#allocation2] sm:$0xff]
        %v248 = vmul.f32 %v245, %v246
        %v249 = vadd.f32 %v248, 0.0
        %v250 = vadd.f32 %v247, %v249
        %251 = vst [vmem:[#allocation2] sm:$0xff] %v250
        %s252 = scalar_lea.vmem [#allocation2], 8
        %v253 = vld [vmem:[%s252] sm:$0xff]
        %v254 = vadd.f32 %v245, 0.0
        %v255 = vadd.f32 %v253, %v254
        %256 = vst [vmem:[%s252] sm:$0xff] %v255
        %s257 = scalar_lea.vmem [#allocation2], 16
        %v258 = vld [vmem:[%s257] sm:$0xff]
        %v259 = vadd.f32 %v246, 0.0
        %v260 = vadd.f32 %v258, %v259
        %261 = vst [vmem:[%s257] sm:$0xff] %v260
        // Predicated region
        $region41: #{tpu_custom_call.1} parent=27 // pred_check
          %p262 = pneg %p232
        $region42: #{tpu_custom_call.1} parent=27 // pred_check_branch
          %264 = sbr.rel (%p262) target = $region44
        $region43: #{tpu_custom_call.1} parent=27 // pred_region
          %v265 = vld [vmem:[#allocation2] sm:$0xff]
          %v266 = vld [vmem:[#allocation2 + $0x8] sm:$0xff]
          %v267 = vld [vmem:[#allocation2 + $0x10] sm:$0xff]
          %268 = vst [vmem:[%s225] sm:$0xff] %v265
          %269 = vst [vmem:[%s225 + $0x8] sm:$0xff] %v266
          %270 = vst [vmem:[%s225 + $0x10] sm:$0xff] %v267
        $region44: #{tpu_custom_call.1} parent=27 // pred_fallthru
          _
        %s271 = sand.u32 %s106, 1
        %s272 = scalar_lea.sflag [#allocation5], %s271
        %s273 = sand.u32 %s106, 1
        %s274 = smul.addr %s273, 24
        %s275 = scalar_lea.vmem [#allocation8], %s274
        // Predicated region
        $region45: #{tpu_custom_call.1} parent=27 // pred_check
          %p276 = pneg %p116
        $region46: #{tpu_custom_call.1} parent=27 // pred_check_branch
          %278 = sbr.rel (%p276) target = $region48
        $region47: #{tpu_custom_call.1} parent=27 // pred_region
          %s280 = ssub.s32 384, 384
          %281 = vsyncadd %s272, %s280
          %s282 = smul.addr %s26, 3
          %s283 = smul.addr %s282, 128
          %s284 = scalar_lea.hbm %s2, %s283
          %s285 = sshll.u32 %s275, 4
          %s286 = int_to_ptr.vmem [resolvable:$true] %s285
          %291 = dma.vmem_to_hbm [thread:$0]  %s286, 384, %s284, %s272, 128, 128, 8
        $region48: #{tpu_custom_call.1} parent=27 // pred_fallthru
          _
      $region28: #{tpu_custom_call.1} parent=5 // pred_fallthru
        _
      %p292 = scmp.le.s32.totalorder 2, %s17
      // Predicated region
      $region49: #{tpu_custom_call.1} parent=5 // pred_check
        %p293 = pneg %p292
      $region50: #{tpu_custom_call.1} parent=5 // pred_check_branch
        %295 = sbr.rel (%p293) target = $region52
      $region51: #{tpu_custom_call.1} parent=5 // pred_region
        %s296 = ssub.s32 %s17, 2
        // Predicated region
        $region53: #{tpu_custom_call.1} parent=51 // pred_check
          %p297 = pneg %p122
        $region54: #{tpu_custom_call.1} parent=51 // pred_check_branch
          %299 = sbr.rel (%p297) target = $region56
        $region55: #{tpu_custom_call.1} parent=51 // pred_region
          %s300 = sand.u32 %s107, 1
          %s301 = scalar_lea.sflag [#allocation5], %s300
          %s302 = sand.u32 %s107, 1
          %s303 = smul.addr %s302, 24
          %s304 = scalar_lea.vmem [#allocation8], %s303
          %305 = dma.done %s301, 384
        $region56: #{tpu_custom_call.1} parent=51 // pred_fallthru
          _
      $region52: #{tpu_custom_call.1} parent=5 // pred_fallthru
        _
    $region6: #{tpu_custom_call.1} parent=1 // loop_footer
      %s21 = sadd.s32 1, %s17
    $region7: #{tpu_custom_call.1} parent=1 // loop_footer_branch
      %16 = sbr.rel target = $region3
    $region8: #{tpu_custom_call.1} parent=1 // loop_exit
      _
    %306 = vsyncpa [#allocation4], 1
    %s307 = scalar_lea.sflag [#allocation4], 1
    %308 = vsyncpa %s307, 1
    %309 = vsyncpa [#allocation7], 1
    %s310 = scalar_lea.sflag [#allocation7], 1
    %311 = vsyncpa %s310, 1
    %312 = vsyncpa [#allocation5], 1
    %s313 = scalar_lea.sflag [#allocation5], 1
    %314 = vsyncpa %s313, 1

</llo_original>
